<compile_context>
chip_gen: v5e
topology: v5e:2x2
jax: 0.10.0
libtpu: 0.0.40
codegen_flags: <defaults>
</compile_context>

<pallas_src>
import functools

import jax
import jax.numpy as jnp
from jax.experimental import pallas as pl
from jax.experimental.pallas import tpu as pltpu


# ----------------------------------------------------------------------------
# Fused Pallas kernel: Bt batch elements per grid step, everything in VMEM.
# ----------------------------------------------------------------------------
def _fused_attention_kernel(img_ref, lab_ref, bias_ref,
                            wq_ref, wkv_ref, wo3_ref, bo_ref,
                            o_ref, *, batch_per_block, q_len, k_len,
                            heads, dim_head):
    Bt, Q, K = batch_per_block, q_len, k_len
    E = img_ref.shape[2]
    inner = heads * dim_head

    # Flatten batch into the MXU M dimension (layout-preserving: Q and K are
    # multiples of the 8-sublane f32 tile).
    x_img_f32 = img_ref[...].reshape(Bt * Q, E)                  # f32 (exact residual)
    x_img = x_img_f32.astype(jnp.bfloat16)
    x_lab = lab_ref[...].reshape(Bt * K, E).astype(jnp.bfloat16)

    # Fused projections. scale already folded into Wq on the host; Wk/Wv fused
    # so the lab path is a single matmul with lane-dense N = 2*inner.
    q_all = jnp.dot(x_img, wq_ref[...],
                    preferred_element_type=jnp.float32)          # (Bt*Q, inner)
    kv_all = jnp.dot(x_lab, wkv_ref[...],
                     preferred_element_type=jnp.float32)         # (Bt*K, 2*inner)
    k_all = kv_all[:, :inner]           # 256-lane (vreg-aligned) split -> free
    v_all = kv_all[:, inner:]

    qb = q_all.astype(jnp.bfloat16)
    kb = k_all.astype(jnp.bfloat16)
    vb = v_all.astype(jnp.bfloat16)

    # One head-major layout transform (heads, rows, dh): replaces the per-head
    # matmul loop and removes the final lane-concat of head outputs.
    def to_heads(x):
        return jnp.stack(
            [x[:, h * dim_head:(h + 1) * dim_head] for h in range(heads)],
            axis=0)

    q_h = to_heads(qb)                  # (heads, Bt*Q, dh)
    k_h = to_heads(kb)                  # (heads, Bt*K, dh)
    v_h = to_heads(vb)                  # (heads, Bt*K, dh)

    wo3 = wo3_ref[...]                  # (heads, dh, E) bf16, VMEM resident
    bo = bo_ref[...]                    # (1, E) f32

    for b in range(Bt):                 # static, small
        qs = q_h[:, b * Q:(b + 1) * Q, :]
        ks = k_h[:, b * K:(b + 1) * K, :]
        vs = v_h[:, b * K:(b + 1) * K, :]
        bias = bias_ref[b]              # (1, K) f32, mask already folded in

        # scores + softmax (f32 math, exact divide for parity with F.softmax)
        s = jnp.einsum("hqd,hkd->hqk", qs, ks,
                       preferred_element_type=jnp.float32)       # (h, Q, K)
        s = s + bias                    # broadcast (1, K) -> (h, Q, K)
        s = s - jnp.max(s, axis=-1, keepdims=True)
        p = jnp.exp(s)
        p = p / jnp.sum(p, axis=-1, keepdims=True)

        o = jnp.einsum("hqk,hkd->hqd", p.astype(jnp.bfloat16), vs,
                       preferred_element_type=jnp.float32)       # (h, Q, dh)

        # Output projection, head-batched; summed over heads (cheap leading-dim
        # adds) instead of a lane-concat + single matmul.
        f = jnp.einsum("hqd,hde->hqe", o.astype(jnp.bfloat16), wo3,
                       preferred_element_type=jnp.float32)       # (h, Q, E)
        fused = f[0]
        for h in range(1, heads):
            fused = fused + f[h]
        fused = fused + bo

        o_ref[b] = (fused + x_img_f32[b * Q:(b + 1) * Q, :]).astype(o_ref.dtype)


def fused_attention(img, lab, bias, wq_t, wkv_t, wo3, bo,
                    *, heads, dim_head, batch_blocks=None):
    """img:(B,Q,E) f32, lab:(B,K,E) f32, bias:(B,1,K) f32, weights bf16."""
    B, Q_len, E = img.shape
    K_len = lab.shape[1]
    inner = heads * dim_head

    # <=2 grid steps: gives v7x's 2 TensorCores one "parallel" step each while
    # keeping per-step overhead minimal on single-TC v5e/v6e (pass
    # batch_blocks=1 there to collapse to a single step).
    if batch_blocks is None:
        batch_blocks = 2 if (B % 2 == 0 and B >= 2) else 1
    assert B % batch_blocks == 0
    Bt = B // batch_blocks

    kern = functools.partial(_fused_attention_kernel, batch_per_block=Bt,
                             q_len=Q_len, k_len=K_len, heads=heads,
                             dim_head=dim_head)
    return pl.pallas_call(
        kern,
        out_shape=jax.ShapeDtypeStruct((B, Q_len, E), jnp.float32),
        grid=(batch_blocks,),
        in_specs=[
            pl.BlockSpec((Bt, Q_len, E), lambda b: (b, 0, 0)),      # image emb
            pl.BlockSpec((Bt, K_len, E), lambda b: (b, 0, 0)),      # lab emb
            pl.BlockSpec((Bt, 1, K_len), lambda b: (b, 0, 0)),      # additive bias
            pl.BlockSpec((E, inner), lambda b: (0, 0)),             # Wq^T * scale
            pl.BlockSpec((E, 2 * inner), lambda b: (0, 0)),         # [Wk^T | Wv^T]
            pl.BlockSpec((heads, dim_head, E), lambda b: (0, 0, 0)),  # Wo^T per head
            pl.BlockSpec((1, E), lambda b: (0, 0)),                 # bo
        ],
        out_specs=pl.BlockSpec((Bt, Q_len, E), lambda b: (b, 0, 0)),
        compiler_params=pltpu.CompilerParams(
            dimension_semantics=("parallel",)),
    )(img, lab, bias, wq_t, wkv_t, wo3, bo)


# ----------------------------------------------------------------------------
# Module: parameters + forward
# ----------------------------------------------------------------------------
def init_attention_params(key, embed_dim, num_lab_tests, heads=4, dim_head=64):
    inner = heads * dim_head
    ks = jax.random.split(key, 8)
    std = 0.02
    return {
        "Wq": jax.random.normal(ks[0], (inner, embed_dim), jnp.float32) * std,
        "Wk": jax.random.normal(ks[1], (inner, embed_dim), jnp.float32) * std,
        "Wv": jax.random.normal(ks[2], (inner, embed_dim), jnp.float32) * std,
        "Wo": jax.random.normal(ks[3], (embed_dim, inner), jnp.float32) * std,
        "bo": jnp.zeros((embed_dim,), jnp.float32),
        "lab_test_bias": jax.random.normal(ks[4], (num_lab_tests + 1, 1),
                                           jnp.float32) * std,
        "value_w": jax.random.normal(ks[5], (1, 1), jnp.float32) * std,
        "value_b": jnp.zeros((1,), jnp.float32),
        "joint_w": jax.random.normal(ks[6], (1, 2), jnp.float32) * std,
        "joint_b": jnp.zeros((1,), jnp.float32),
    }


def attention_forward(params, image_embeddings, lab_embeddings=None, mask=None,
                      lab_test_indices=None, lab_values=None,
                      heads=4, dim_head=64):
    if lab_embeddings is None:
        lab_embeddings = image_embeddings

    B, Q_len, E = image_embeddings.shape
    K_len = lab_embeddings.shape[1]
    scale = float(dim_head) ** (-0.5)

    # --- tiny glue in plain JAX: embedding lookup + Linear(1,1)/Linear(2,1)+tanh ---
    if lab_test_indices is not None and lab_values is not None:
        test_bias = params["lab_test_bias"][lab_test_indices, 0]              # (B, K)
        value_bias = lab_values * params["value_w"][0, 0] + params["value_b"][0]
        joint = jnp.stack([test_bias, value_bias], axis=-1)                   # (B, K, 2)
        tv = jnp.tanh(joint @ params["joint_w"].T + params["joint_b"])[..., 0]
        bias = jnp.clip(tv, -5.0, 5.0)                                        # (B, K)
    else:
        bias = jnp.zeros((B, K_len), jnp.float32)

    # Fold masked_fill(mask == 0, -1e9) into the additive bias (no mask DMA
    # stream, no per-element select in the kernel).
    if mask is not None:
        bias = bias + jnp.where(mask == 0, jnp.float32(-1e9), jnp.float32(0.0))
    bias = bias.reshape(B, 1, K_len).astype(jnp.float32)

    img = image_embeddings.astype(jnp.float32)
    lab = lab_embeddings.astype(jnp.float32)

    # Host-side weight prep: fold scale into Wq, fuse Wk/Wv, pre-split Wo per head.
    wq_t = (params["Wq"] * scale).T.astype(jnp.bfloat16)                      # (E, inner)
    wkv_t = jnp.concatenate([params["Wk"].T, params["Wv"].T],
                            axis=1).astype(jnp.bfloat16)                      # (E, 2*inner)
    wo3 = params["Wo"].T.reshape(heads, dim_head, E).astype(jnp.bfloat16)     # (h, dh, E)
    bo = params["bo"].reshape(1, E).astype(jnp.float32)

    return fused_attention(img, lab, bias, wq_t, wkv_t, wo3, bo,
                           heads=heads, dim_head=dim_head)


# ----------------------------------------------------------------------------
# Demo
# ----------------------------------------------------------------------------
if __name__ == "__main__":
    B, Q_len, K_len = 2, 8, 8
    embed_dim, heads, dim_head = 32, 4, 64
    num_lab_tests = 10

    key = jax.random.PRNGKey(0)
    kp, k1, k2, k3, k4, k5 = jax.random.split(key, 6)

    params = init_attention_params(kp, embed_dim, num_lab_tests,
                                   heads=heads, dim_head=dim_head)

    image_embeddings = jax.random.normal(k1, (B, Q_len, embed_dim), jnp.float32)
    lab_embeddings = jax.random.normal(k2, (B, K_len, embed_dim), jnp.float32)
    mask = (jax.random.uniform(k3, (B, K_len)) > 0.2).astype(jnp.int32)
    lab_test_indices = jax.random.randint(k4, (B, K_len), 0, num_lab_tests + 1)
    lab_values = jax.random.normal(k5, (B, K_len), jnp.float32)

    fwd = jax.jit(functools.partial(attention_forward,
                                    heads=heads, dim_head=dim_head))
    out = fwd(params, image_embeddings, lab_embeddings,
              mask=mask, lab_test_indices=lab_test_indices,
              lab_values=lab_values)
    out = jax.block_until_ready(out)

    assert out.shape == (B, Q_len, embed_dim), out.shape
    assert bool(jnp.all(jnp.isfinite(out)))
    print("KERNEL_OK")
</pallas_src>

<mosaic_0001>
module attributes {stable_mosaic.version = 11 : i64} {
  func.func @_fused_attention_kernel(%arg0: i32, %arg1: memref<1x8x32xf32, #tpu.memory_space<vmem>>, %arg2: memref<1x8x32xf32, #tpu.memory_space<vmem>>, %arg3: memref<1x1x8xf32, #tpu.memory_space<vmem>>, %arg4: memref<32x256xbf16, #tpu.memory_space<vmem>>, %arg5: memref<32x512xbf16, #tpu.memory_space<vmem>>, %arg6: memref<4x64x32xbf16, #tpu.memory_space<vmem>>, %arg7: memref<1x32xf32, #tpu.memory_space<vmem>>, %arg8: memref<1x8x32xf32, #tpu.memory_space<vmem>>) attributes {dimension_semantics = [#tpu.dimension_semantics<parallel>], iteration_bounds = array<i64: 2>, scalar_prefetch = 0 : i64, scratch_operands = 0 : i64, tpu.core_type = #tpu.core_type<tc>, window_params = [{transform_indices = @transform_0, window_bounds = array<i64: 1, 8, 32>}, {transform_indices = @transform_1, window_bounds = array<i64: 1, 8, 32>}, {transform_indices = @transform_2, window_bounds = array<i64: 1, 1, 8>}, {pipeline_mode = #tpu.pipeline_mode<synchronous>, transform_indices = @transform_3, window_bounds = array<i64: 32, 256>}, {pipeline_mode = #tpu.pipeline_mode<synchronous>, transform_indices = @transform_4, window_bounds = array<i64: 32, 512>}, {pipeline_mode = #tpu.pipeline_mode<synchronous>, transform_indices = @transform_5, window_bounds = array<i64: 4, 64, 32>}, {pipeline_mode = #tpu.pipeline_mode<synchronous>, transform_indices = @transform_6, window_bounds = array<i64: 1, 32>}, {transform_indices = @transform_7, window_bounds = array<i64: 1, 8, 32>}]} {
    %c0 = arith.constant 0 : index
    %c0_0 = arith.constant 0 : index
    %c0_1 = arith.constant 0 : index
    %0 = vector.load %arg1[%c0, %c0_0, %c0_1] : memref<1x8x32xf32, #tpu.memory_space<vmem>>, vector<1x8x32xf32>
    %1 = vector.shape_cast %0 : vector<1x8x32xf32> to vector<8x32xf32>
    %2 = arith.truncf %1 : vector<8x32xf32> to vector<8x32xbf16>
    %c0_2 = arith.constant 0 : index
    %c0_3 = arith.constant 0 : index
    %c0_4 = arith.constant 0 : index
    %3 = vector.load %arg2[%c0_2, %c0_3, %c0_4] : memref<1x8x32xf32, #tpu.memory_space<vmem>>, vector<1x8x32xf32>
    %4 = vector.shape_cast %3 : vector<1x8x32xf32> to vector<8x32xf32>
    %5 = arith.truncf %4 : vector<8x32xf32> to vector<8x32xbf16>
    %c0_5 = arith.constant 0 : index
    %c0_6 = arith.constant 0 : index
    %6 = vector.load %arg4[%c0_5, %c0_6] : memref<32x256xbf16, #tpu.memory_space<vmem>>, vector<32x256xbf16>
    %cst = arith.constant dense<0.000000e+00> : vector<8x256xf32>
    %7 = tpu.matmul %2, %6, %cst {dimension_numbers = #tpu.dot_dimension_numbers<[1], [0], [0], [1], [0, 0, 1, 1], [], []>} : vector<8x32xbf16>, vector<32x256xbf16>, vector<8x256xf32> -> vector<8x256xf32>
    %c0_7 = arith.constant 0 : index
    %c0_8 = arith.constant 0 : index
    %8 = vector.load %arg5[%c0_7, %c0_8] : memref<32x512xbf16, #tpu.memory_space<vmem>>, vector<32x512xbf16>
    %cst_9 = arith.constant dense<0.000000e+00> : vector<8x512xf32>
    %9 = tpu.matmul %5, %8, %cst_9 {dimension_numbers = #tpu.dot_dimension_numbers<[1], [0], [0], [1], [0, 0, 1, 1], [], []>} : vector<8x32xbf16>, vector<32x512xbf16>, vector<8x512xf32> -> vector<8x512xf32>
    %10 = vector.extract_strided_slice %9 {offsets = [0, 0], sizes = [8, 256], strides = [1, 1]} : vector<8x512xf32> to vector<8x256xf32>
    %11 = vector.extract_strided_slice %9 {offsets = [0, 256], sizes = [8, 256], strides = [1, 1]} : vector<8x512xf32> to vector<8x256xf32>
    %12 = arith.truncf %7 : vector<8x256xf32> to vector<8x256xbf16>
    %13 = arith.truncf %10 : vector<8x256xf32> to vector<8x256xbf16>
    %14 = arith.truncf %11 : vector<8x256xf32> to vector<8x256xbf16>
    %15 = vector.extract_strided_slice %12 {offsets = [0, 0], sizes = [8, 64], strides = [1, 1]} : vector<8x256xbf16> to vector<8x64xbf16>
    %16 = vector.extract_strided_slice %12 {offsets = [0, 64], sizes = [8, 64], strides = [1, 1]} : vector<8x256xbf16> to vector<8x64xbf16>
    %17 = vector.extract_strided_slice %12 {offsets = [0, 128], sizes = [8, 64], strides = [1, 1]} : vector<8x256xbf16> to vector<8x64xbf16>
    %18 = vector.extract_strided_slice %12 {offsets = [0, 192], sizes = [8, 64], strides = [1, 1]} : vector<8x256xbf16> to vector<8x64xbf16>
    %19 = vector.shape_cast %15 : vector<8x64xbf16> to vector<1x8x64xbf16>
    %20 = vector.shape_cast %16 : vector<8x64xbf16> to vector<1x8x64xbf16>
    %21 = vector.shape_cast %17 : vector<8x64xbf16> to vector<1x8x64xbf16>
    %22 = vector.shape_cast %18 : vector<8x64xbf16> to vector<1x8x64xbf16>
    %23 = tpu.concatenate %19, %20, %21, %22 in 0 : vector<1x8x64xbf16>, vector<1x8x64xbf16>, vector<1x8x64xbf16>, vector<1x8x64xbf16> -> vector<4x8x64xbf16>
    %24 = vector.extract_strided_slice %13 {offsets = [0, 0], sizes = [8, 64], strides = [1, 1]} : vector<8x256xbf16> to vector<8x64xbf16>
    %25 = vector.extract_strided_slice %13 {offsets = [0, 64], sizes = [8, 64], strides = [1, 1]} : vector<8x256xbf16> to vector<8x64xbf16>
    %26 = vector.extract_strided_slice %13 {offsets = [0, 128], sizes = [8, 64], strides = [1, 1]} : vector<8x256xbf16> to vector<8x64xbf16>
    %27 = vector.extract_strided_slice %13 {offsets = [0, 192], sizes = [8, 64], strides = [1, 1]} : vector<8x256xbf16> to vector<8x64xbf16>
    %28 = vector.shape_cast %24 : vector<8x64xbf16> to vector<1x8x64xbf16>
    %29 = vector.shape_cast %25 : vector<8x64xbf16> to vector<1x8x64xbf16>
    %30 = vector.shape_cast %26 : vector<8x64xbf16> to vector<1x8x64xbf16>
    %31 = vector.shape_cast %27 : vector<8x64xbf16> to vector<1x8x64xbf16>
    %32 = tpu.concatenate %28, %29, %30, %31 in 0 : vector<1x8x64xbf16>, vector<1x8x64xbf16>, vector<1x8x64xbf16>, vector<1x8x64xbf16> -> vector<4x8x64xbf16>
    %33 = vector.extract_strided_slice %14 {offsets = [0, 0], sizes = [8, 64], strides = [1, 1]} : vector<8x256xbf16> to vector<8x64xbf16>
    %34 = vector.extract_strided_slice %14 {offsets = [0, 64], sizes = [8, 64], strides = [1, 1]} : vector<8x256xbf16> to vector<8x64xbf16>
    %35 = vector.extract_strided_slice %14 {offsets = [0, 128], sizes = [8, 64], strides = [1, 1]} : vector<8x256xbf16> to vector<8x64xbf16>
    %36 = vector.extract_strided_slice %14 {offsets = [0, 192], sizes = [8, 64], strides = [1, 1]} : vector<8x256xbf16> to vector<8x64xbf16>
    %37 = vector.shape_cast %33 : vector<8x64xbf16> to vector<1x8x64xbf16>
    %38 = vector.shape_cast %34 : vector<8x64xbf16> to vector<1x8x64xbf16>
    %39 = vector.shape_cast %35 : vector<8x64xbf16> to vector<1x8x64xbf16>
    %40 = vector.shape_cast %36 : vector<8x64xbf16> to vector<1x8x64xbf16>
    %41 = tpu.concatenate %37, %38, %39, %40 in 0 : vector<1x8x64xbf16>, vector<1x8x64xbf16>, vector<1x8x64xbf16>, vector<1x8x64xbf16> -> vector<4x8x64xbf16>
    %c0_10 = arith.constant 0 : index
    %c0_11 = arith.constant 0 : index
    %c0_12 = arith.constant 0 : index
    %42 = vector.load %arg6[%c0_10, %c0_11, %c0_12] : memref<4x64x32xbf16, #tpu.memory_space<vmem>>, vector<4x64x32xbf16>
    %c0_13 = arith.constant 0 : index
    %c0_14 = arith.constant 0 : index
    %43 = vector.load %arg7[%c0_13, %c0_14] : memref<1x32xf32, #tpu.memory_space<vmem>>, vector<1x32xf32>
    %c0_15 = arith.constant 0 : index
    %c0_16 = arith.constant 0 : index
    %c0_17 = arith.constant 0 : index
    %44 = vector.load %arg3[%c0_15, %c0_16, %c0_17] : memref<1x1x8xf32, #tpu.memory_space<vmem>>, vector<1x1x8xf32>
    %45 = vector.shape_cast %44 : vector<1x1x8xf32> to vector<1x8xf32>
    "tpu.trace_start"() <{level = 10 : i32, message = "hqd,hkd->hqk"}> : () -> ()
    %cst_18 = arith.constant dense<0.000000e+00> : vector<4x8x8xf32>
    %46 = tpu.matmul %23, %32, %cst_18 {dimension_numbers = #tpu.dot_dimension_numbers<[2], [2], [1], [1], [0, 0, 0, 1, 1, 1], [0], [0]>} : vector<4x8x64xbf16>, vector<4x8x64xbf16>, vector<4x8x8xf32> -> vector<4x8x8xf32>
    "tpu.trace_stop"() : () -> ()
    %47 = vector.shape_cast %45 : vector<1x8xf32> to vector<1x1x8xf32>
    %48 = vector.broadcast %47 : vector<1x1x8xf32> to vector<4x8x8xf32>
    %49 = arith.addf %46, %48 : vector<4x8x8xf32>
    %cst_19 = arith.constant dense<0xFF800000> : vector<4x8xf32>
    %50 = vector.multi_reduction <maximumf>, %49, %cst_19 [2] : vector<4x8x8xf32> to vector<4x8xf32>
    %51 = vector.shape_cast %50 : vector<4x8xf32> to vector<4x8x1xf32>
    %52 = vector.broadcast %51 : vector<4x8x1xf32> to vector<4x8x8xf32>
    %53 = arith.subf %49, %52 : vector<4x8x8xf32>
    %54 = math.exp %53 : vector<4x8x8xf32>
    %cst_20 = arith.constant dense<0.000000e+00> : vector<4x8xf32>
    %55 = vector.multi_reduction <add>, %54, %cst_20 [2] : vector<4x8x8xf32> to vector<4x8xf32>
    %56 = vector.shape_cast %55 : vector<4x8xf32> to vector<4x8x1xf32>
    %57 = vector.broadcast %56 : vector<4x8x1xf32> to vector<4x8x8xf32>
    %58 = arith.divf %54, %57 : vector<4x8x8xf32>
    %59 = arith.truncf %58 : vector<4x8x8xf32> to vector<4x8x8xbf16>
    "tpu.trace_start"() <{level = 10 : i32, message = "hqk,hkd->hqd"}> : () -> ()
    %cst_21 = arith.constant dense<0.000000e+00> : vector<4x8x64xf32>
    %60 = tpu.matmul %59, %41, %cst_21 {dimension_numbers = #tpu.dot_dimension_numbers<[2], [1], [1], [2], [0, 0, 0, 1, 1, 2], [0], [0]>} : vector<4x8x8xbf16>, vector<4x8x64xbf16>, vector<4x8x64xf32> -> vector<4x8x64xf32>
    "tpu.trace_stop"() : () -> ()
    %61 = arith.truncf %60 : vector<4x8x64xf32> to vector<4x8x64xbf16>
    "tpu.trace_start"() <{level = 10 : i32, message = "hqd,hde->hqe"}> : () -> ()
    %cst_22 = arith.constant dense<0.000000e+00> : vector<4x8x32xf32>
    %62 = tpu.matmul %61, %42, %cst_22 {dimension_numbers = #tpu.dot_dimension_numbers<[2], [1], [1], [2], [0, 0, 0, 1, 1, 2], [0], [0]>} : vector<4x8x64xbf16>, vector<4x64x32xbf16>, vector<4x8x32xf32> -> vector<4x8x32xf32>
    "tpu.trace_stop"() : () -> ()
    %63 = vector.extract_strided_slice %62 {offsets = [0, 0, 0], sizes = [1, 8, 32], strides = [1, 1, 1]} : vector<4x8x32xf32> to vector<1x8x32xf32>
    %64 = vector.shape_cast %63 : vector<1x8x32xf32> to vector<8x32xf32>
    %65 = vector.extract_strided_slice %62 {offsets = [1, 0, 0], sizes = [1, 8, 32], strides = [1, 1, 1]} : vector<4x8x32xf32> to vector<1x8x32xf32>
    %66 = vector.shape_cast %65 : vector<1x8x32xf32> to vector<8x32xf32>
    %67 = arith.addf %64, %66 : vector<8x32xf32>
    %68 = vector.extract_strided_slice %62 {offsets = [2, 0, 0], sizes = [1, 8, 32], strides = [1, 1, 1]} : vector<4x8x32xf32> to vector<1x8x32xf32>
    %69 = vector.shape_cast %68 : vector<1x8x32xf32> to vector<8x32xf32>
    %70 = arith.addf %67, %69 : vector<8x32xf32>
    %71 = vector.extract_strided_slice %62 {offsets = [3, 0, 0], sizes = [1, 8, 32], strides = [1, 1, 1]} : vector<4x8x32xf32> to vector<1x8x32xf32>
    %72 = vector.shape_cast %71 : vector<1x8x32xf32> to vector<8x32xf32>
    %73 = arith.addf %70, %72 : vector<8x32xf32>
    %74 = vector.broadcast %43 : vector<1x32xf32> to vector<8x32xf32>
    %75 = arith.addf %73, %74 : vector<8x32xf32>
    %76 = arith.addf %75, %1 : vector<8x32xf32>
    %c0_23 = arith.constant 0 : index
    %c0_24 = arith.constant 0 : index
    %c0_25 = arith.constant 0 : index
    %77 = vector.load %arg8[%c0_23, %c0_24, %c0_25] : memref<1x8x32xf32, #tpu.memory_space<vmem>>, vector<1x8x32xf32>
    %78 = vector.shape_cast %77 : vector<1x8x32xf32> to vector<8x32xf32>
    %79 = vector.shape_cast %76 : vector<8x32xf32> to vector<1x8x32xf32>
    tpu.vector_store %arg8[%c0_23, %c0_24, %c0_25], %79 {strides = array<i32>} : memref<1x8x32xf32, #tpu.memory_space<vmem>>, vector<1x8x32xf32>,
    return
  }
  func.func @transform_0(%arg0: i32) -> (i32, i32, i32) {
    %c0_i32 = arith.constant 0 : i32
    %c0_i32_0 = arith.constant 0 : i32
    %c0_i32_1 = arith.constant 0 : i32
    return %arg0, %c0_i32, %c0_i32_0 : i32, i32, i32
  }
  func.func @transform_1(%arg0: i32) -> (i32, i32, i32) {
    %c0_i32 = arith.constant 0 : i32
    %c0_i32_0 = arith.constant 0 : i32
    %c0_i32_1 = arith.constant 0 : i32
    return %arg0, %c0_i32, %c0_i32_0 : i32, i32, i32
  }
  func.func @transform_2(%arg0: i32) -> (i32, i32, i32) {
    %c0_i32 = arith.constant 0 : i32
    %c0_i32_0 = arith.constant 0 : i32
    %c0_i32_1 = arith.constant 0 : i32
    return %arg0, %c0_i32, %c0_i32_0 : i32, i32, i32
  }
  func.func @transform_3(%arg0: i32) -> (i32, i32) {
    %c0_i32 = arith.constant 0 : i32
    %c0_i32_0 = arith.constant 0 : i32
    %c0_i32_1 = arith.constant 0 : i32
    return %c0_i32, %c0_i32_0 : i32, i32
  }
  func.func @transform_4(%arg0: i32) -> (i32, i32) {
    %c0_i32 = arith.constant 0 : i32
    %c0_i32_0 = arith.constant 0 : i32
    %c0_i32_1 = arith.constant 0 : i32
    return %c0_i32, %c0_i32_0 : i32, i32
  }
  func.func @transform_5(%arg0: i32) -> (i32, i32, i32) {
    %c0_i32 = arith.constant 0 : i32
    %c0_i32_0 = arith.constant 0 : i32
    %c0_i32_1 = arith.constant 0 : i32
    %c0_i32_2 = arith.constant 0 : i32
    return %c0_i32, %c0_i32_0, %c0_i32_1 : i32, i32, i32
  }
  func.func @transform_6(%arg0: i32) -> (i32, i32) {
    %c0_i32 = arith.constant 0 : i32
    %c0_i32_0 = arith.constant 0 : i32
    %c0_i32_1 = arith.constant 0 : i32
    return %c0_i32, %c0_i32_0 : i32, i32
  }
  func.func @transform_7(%arg0: i32) -> (i32, i32, i32) {
    %c0_i32 = arith.constant 0 : i32
    %c0_i32_0 = arith.constant 0 : i32
    %c0_i32_1 = arith.constant 0 : i32
    return %arg0, %c0_i32, %c0_i32_0 : i32, i32, i32
  }
}

</mosaic_0001>

<llo_original>
// kernel: attention_forward.1
$region0: #{attention_forward.1}
  #allocation0 [shape = 'u32[]', space=smem, size = 0x4, offset = 0x4, fixed_abs, tag = 'smem constant byte address 0x4 - core index']
  #allocation1 [shape = 'u32[72,128]{1,0:T(1,128)}', space=vmem, size = 0x9000, scoped, tag = 'internal scratch']
  %s0 = inlined_call_operand.vmem [shape: f32[2,8,32], index: 0, kind: input, shape index: {}]
  %s1 = inlined_call_operand.vmem [shape: f32[2,8,32], index: 1, kind: input, shape index: {}]
  %s2 = inlined_call_operand.vmem [shape: f32[2,1,8], index: 2, kind: input, shape index: {}]
  %s3 = inlined_call_operand.vmem [shape: bf16[32,256], index: 3, kind: input, shape index: {}]
  %s4 = inlined_call_operand.vmem [shape: bf16[32,512], index: 4, kind: input, shape index: {}]
  %s5 = inlined_call_operand.vmem [shape: bf16[4,64,32], index: 5, kind: input, shape index: {}]
  %s6 = inlined_call_operand.vmem [shape: f32[1,32], index: 6, kind: input, shape index: {}]
  %s7 = inlined_call_operand.hbm [shape: f32[2,8,32], index: 7, kind: output, shape index: {}]
  %s8 = sld [smem:[#allocation0]]
  $region61: #{attention_forward.1} parent=0
    _
  %s10 = ssub.s32 1, %s8
  %s11 = scalar_select 0, %s10, %s8
  $region1: #{attention_forward.1} parent=0
    #allocation2 [shape = 'u8[8192]{0}', space=vmem, size = 0x2000, scoped, tag = 'output window, operand 0']
    #allocation3 [shape = 's32[2]{0}', space=sflag, size = 0x8, scoped, tag = 'scoped memory for attention_forward.1']
    %12 = vsyncpa [#allocation3], 0
    %s13 = scalar_lea.sflag [#allocation3], 1
    %14 = vsyncpa %s13, 0
    loop: start=0, step=1, limit=4
    $region2: #{attention_forward.1} parent=1 // loop_pre_header
      _
    $region3: #{attention_forward.1} parent=1 // loop_header
      %s16 = sphi 0, %s20
      %p17 = scmp.ge.s32.totalorder %s16, 4
      %s26 = sphi 0, %s28
      %s29 = sphi 0, %s26
      %s30 = sphi 0, %s29
      %s46 = sphi 0, %s30
      %s52 = sphi 0, %s54
      %s55 = sphi 0, %s52
      %s56 = sphi 0, %s55
      %s72 = sphi 0, %s56
      %s78 = sphi 0, %s80
      %s81 = sphi 0, %s78
      %s82 = sphi 0, %s81
      %s98 = sphi 0, %s82
      %s102 = sphi 0, %s102
      %s104 = sphi 0, %s102
      %s105 = sphi 0, %s104
      %s119 = sphi 0, %s105
      %s123 = sphi 0, %s123
      %s125 = sphi 0, %s123
      %s126 = sphi 0, %s125
      %s140 = sphi 0, %s126
      %s144 = sphi 0, %s144
      %s146 = sphi 0, %s144
      %s147 = sphi 0, %s146
      %s161 = sphi 0, %s147
      %s165 = sphi 0, %s165
      %s167 = sphi 0, %s165
      %s168 = sphi 0, %s167
      %s182 = sphi 0, %s168
      %s188 = sphi 0, %s190
      %s191 = sphi 0, %s188
      %s192 = sphi 0, %s191
      %s208 = sphi 0, %s192
    $region4: #{attention_forward.1} parent=1 // loop_header_branch
      %19 = sbr.rel (%p17) target = $region8
    $region5: #{attention_forward.1} parent=1 // loop_body
      %s21 = ssub.s32 %s16, 1
      %s22 = ssub.s32 %s16, 2
      %s23 = sadd.s32 %s16, 1
      %s24 = ssub.s32 %s16, %s23
      %p25 = scmp.eq.s32.totalorder %s24, 0
      %s27 = sadd.s32 %s26, 1
      %s28 = scalar_select %p25, %s26, %s27
      %p31 = pneg %p25
      %p32 = scmp.eq.s32.totalorder %s16, 1
      %p33 = por %p31, %p32
      %p34 = scmp.ne.s32.totalorder %s26, %s29
      %p35 = scmp.eq.s32.totalorder %s16, 0
      %p36 = por %p34, %p35
      %p37 = scmp.ne.s32.totalorder %s26, %s29
      %p38 = scmp.eq.s32.totalorder %s21, 1
      %p39 = por %p37, %p38
      %p40 = scmp.ne.s32.totalorder %s29, %s30
      %p41 = scmp.eq.s32.totalorder %s21, 0
      %p42 = por %p40, %p41
      %p43 = scmp.ne.s32.totalorder %s29, %s30
      %p44 = scmp.eq.s32.totalorder %s22, 1
      %p45 = por %p43, %p44
      %p47 = scmp.ne.s32.totalorder %s30, %s46
      %p48 = scmp.eq.s32.totalorder %s22, 0
      %p49 = por %p47, %p48
      %s50 = ssub.s32 %s16, %s23
      %p51 = scmp.eq.s32.totalorder %s50, 0
      %s53 = sadd.s32 %s52, 1
      %s54 = scalar_select %p51, %s52, %s53
      %p57 = pneg %p51
      %p58 = scmp.eq.s32.totalorder %s16, 1
      %p59 = por %p57, %p58
      %p60 = scmp.ne.s32.totalorder %s52, %s55
      %p61 = scmp.eq.s32.totalorder %s16, 0
      %p62 = por %p60, %p61
      %p63 = scmp.ne.s32.totalorder %s52, %s55
      %p64 = scmp.eq.s32.totalorder %s21, 1
      %p65 = por %p63, %p64
      %p66 = scmp.ne.s32.totalorder %s55, %s56
      %p67 = scmp.eq.s32.totalorder %s21, 0
      %p68 = por %p66, %p67
      %p69 = scmp.ne.s32.totalorder %s55, %s56
      %p70 = scmp.eq.s32.totalorder %s22, 1
      %p71 = por %p69, %p70
      %p73 = scmp.ne.s32.totalorder %s56, %s72
      %p74 = scmp.eq.s32.totalorder %s22, 0
      %p75 = por %p73, %p74
      %s76 = ssub.s32 %s16, %s23
      %p77 = scmp.eq.s32.totalorder %s76, 0
      %s79 = sadd.s32 %s78, 1
      %s80 = scalar_select %p77, %s78, %s79
      %p83 = pneg %p77
      %p84 = scmp.eq.s32.totalorder %s16, 1
      %p85 = por %p83, %p84
      %p86 = scmp.ne.s32.totalorder %s78, %s81
      %p87 = scmp.eq.s32.totalorder %s16, 0
      %p88 = por %p86, %p87
      %p89 = scmp.ne.s32.totalorder %s78, %s81
      %p90 = scmp.eq.s32.totalorder %s21, 1
      %p91 = por %p89, %p90
      %p92 = scmp.ne.s32.totalorder %s81, %s82
      %p93 = scmp.eq.s32.totalorder %s21, 0
      %p94 = por %p92, %p93
      %p95 = scmp.ne.s32.totalorder %s81, %s82
      %p96 = scmp.eq.s32.totalorder %s22, 1
      %p97 = por %p95, %p96
      %p99 = scmp.ne.s32.totalorder %s82, %s98
      %p100 = scmp.eq.s32.totalorder %s22, 0
      %p101 = por %p99, %p100
      %s103 = sadd.s32 %s102, 1
      %p106 = scmp.eq.s32.totalorder %s16, 1
      %p107 = scmp.ne.s32.totalorder %s102, %s104
      %p108 = scmp.eq.s32.totalorder %s16, 0
      %p109 = por %p107, %p108
      %p110 = scmp.ne.s32.totalorder %s102, %s104
      %p111 = scmp.eq.s32.totalorder %s21, 1
      %p112 = por %p110, %p111
      %p113 = scmp.ne.s32.totalorder %s104, %s105
      %p114 = scmp.eq.s32.totalorder %s21, 0
      %p115 = por %p113, %p114
      %p116 = scmp.ne.s32.totalorder %s104, %s105
      %p117 = scmp.eq.s32.totalorder %s22, 1
      %p118 = por %p116, %p117
      %p120 = scmp.ne.s32.totalorder %s105, %s119
      %p121 = scmp.eq.s32.totalorder %s22, 0
      %p122 = por %p120, %p121
      %s124 = sadd.s32 %s123, 1
      %p127 = scmp.eq.s32.totalorder %s16, 1
      %p128 = scmp.ne.s32.totalorder %s123, %s125
      %p129 = scmp.eq.s32.totalorder %s16, 0
      %p130 = por %p128, %p129
      %p131 = scmp.ne.s32.totalorder %s123, %s125
      %p132 = scmp.eq.s32.totalorder %s21, 1
      %p133 = por %p131, %p132
      %p134 = scmp.ne.s32.totalorder %s125, %s126
      %p135 = scmp.eq.s32.totalorder %s21, 0
      %p136 = por %p134, %p135
      %p137 = scmp.ne.s32.totalorder %s125, %s126
      %p138 = scmp.eq.s32.totalorder %s22, 1
      %p139 = por %p137, %p138
      %p141 = scmp.ne.s32.totalorder %s126, %s140
      %p142 = scmp.eq.s32.totalorder %s22, 0
      %p143 = por %p141, %p142
      %s145 = sadd.s32 %s144, 1
      %p148 = scmp.eq.s32.totalorder %s16, 1
      %p149 = scmp.ne.s32.totalorder %s144, %s146
      %p150 = scmp.eq.s32.totalorder %s16, 0
      %p151 = por %p149, %p150
      %p152 = scmp.ne.s32.totalorder %s144, %s146
      %p153 = scmp.eq.s32.totalorder %s21, 1
      %p154 = por %p152, %p153
      %p155 = scmp.ne.s32.totalorder %s146, %s147
      %p156 = scmp.eq.s32.totalorder %s21, 0
      %p157 = por %p155, %p156
      %p158 = scmp.ne.s32.totalorder %s146, %s147
      %p159 = scmp.eq.s32.totalorder %s22, 1
      %p160 = por %p158, %p159
      %p162 = scmp.ne.s32.totalorder %s147, %s161
      %p163 = scmp.eq.s32.totalorder %s22, 0
      %p164 = por %p162, %p163
      %s166 = sadd.s32 %s165, 1
      %p169 = scmp.eq.s32.totalorder %s16, 1
      %p170 = scmp.ne.s32.totalorder %s165, %s167
      %p171 = scmp.eq.s32.totalorder %s16, 0
      %p172 = por %p170, %p171
      %p173 = scmp.ne.s32.totalorder %s165, %s167
      %p174 = scmp.eq.s32.totalorder %s21, 1
      %p175 = por %p173, %p174
      %p176 = scmp.ne.s32.totalorder %s167, %s168
      %p177 = scmp.eq.s32.totalorder %s21, 0
      %p178 = por %p176, %p177
      %p179 = scmp.ne.s32.totalorder %s167, %s168
      %p180 = scmp.eq.s32.totalorder %s22, 1
      %p181 = por %p179, %p180
      %p183 = scmp.ne.s32.totalorder %s168, %s182
      %p184 = scmp.eq.s32.totalorder %s22, 0
      %p185 = por %p183, %p184
      %s186 = ssub.s32 %s16, %s23
      %p187 = scmp.eq.s32.totalorder %s186, 0
      %s189 = sadd.s32 %s188, 1
      %s190 = scalar_select %p187, %s188, %s189
      %p193 = pneg %p187
      %p194 = scmp.eq.s32.totalorder %s16, 1
      %p195 = por %p193, %p194
      %p196 = scmp.ne.s32.totalorder %s188, %s191
      %p197 = scmp.eq.s32.totalorder %s16, 0
      %p198 = por %p196, %p197
      %p199 = scmp.ne.s32.totalorder %s188, %s191
      %p200 = scmp.eq.s32.totalorder %s21, 1
      %p201 = por %p199, %p200
      %p202 = scmp.ne.s32.totalorder %s191, %s192
      %p203 = scmp.eq.s32.totalorder %s21, 0
      %p204 = por %p202, %p203
      %p205 = scmp.ne.s32.totalorder %s191, %s192
      %p206 = scmp.eq.s32.totalorder %s22, 1
      %p207 = por %p205, %p206
      %p209 = scmp.ne.s32.totalorder %s192, %s208
      %p210 = scmp.eq.s32.totalorder %s22, 0
      %p211 = por %p209, %p210
      %p212 = scmp.le.s32.totalorder 1, %s16
      %p213 = scmp.lt.s32.totalorder %s16, 3
      %p214 = pnand %p212, %p213
      %p215 = pneg %p214
      // Predicated region
      $region9: #{attention_forward.1} parent=5 // pred_check
        _
      $region10: #{attention_forward.1} parent=5 // pred_check_branch
        %217 = sbr.rel (%p214) target = $region12
      $region11: #{attention_forward.1} parent=5 // pred_region
        %s218 = ssub.s32 %s16, 1
        // Predicated region
        $region13: #{attention_forward.1} parent=11 // pred_check
          %p219 = pneg %p115
        $region14: #{attention_forward.1} parent=11 // pred_check_branch
          %221 = sbr.rel (%p219) target = $region16
        $region15: #{attention_forward.1} parent=11 // pred_region
          _
        $region16: #{attention_forward.1} parent=11 // pred_fallthru
          _
        // Predicated region
        $region17: #{attention_forward.1} parent=11 // pred_check
          %p222 = pneg %p136
        $region18: #{attention_forward.1} parent=11 // pred_check_branch
          %224 = sbr.rel (%p222) target = $region20
        $region19: #{attention_forward.1} parent=11 // pred_region
          _
        $region20: #{attention_forward.1} parent=11 // pred_fallthru
          _
        // Predicated region
        $region21: #{attention_forward.1} parent=11 // pred_check
          %p225 = pneg %p157
        $region22: #{attention_forward.1} parent=11 // pred_check_branch
          %227 = sbr.rel (%p225) target = $region24
        $region23: #{attention_forward.1} parent=11 // pred_region
          _
        $region24: #{attention_forward.1} parent=11 // pred_fallthru
          _
        // Predicated region
        $region25: #{attention_forward.1} parent=11 // pred_check
          %p228 = pneg %p178
        $region26: #{attention_forward.1} parent=11 // pred_check_branch
          %230 = sbr.rel (%p228) target = $region28
        $region27: #{attention_forward.1} parent=11 // pred_region
          _
        $region28: #{attention_forward.1} parent=11 // pred_fallthru
          _
      $region12: #{attention_forward.1} parent=5 // pred_fallthru
        _
      %p231 = scmp.lt.s32.totalorder %s16, 2
      // Predicated region
      $region29: #{attention_forward.1} parent=5 // pred_check
        %p232 = pneg %p231
      $region30: #{attention_forward.1} parent=5 // pred_check_branch
        %234 = sbr.rel (%p232) target = $region32
      $region31: #{attention_forward.1} parent=5 // pred_region
        // Predicated region
        $region33: #{attention_forward.1} parent=31 // pred_check
          %p235 = pneg %p36
        $region34: #{attention_forward.1} parent=31 // pred_check_branch
          %237 = sbr.rel (%p235) target = $region36
        $region35: #{attention_forward.1} parent=31 // pred_region
          %p238 = scmp.lt.s32.totalorder %s16, 1
          %s239 = scalar_select %p238, %s16, 1
          %s240 = smul.addr %s239, 8
          %s241 = scalar_lea.vmem %s0, %s240
        $region36: #{attention_forward.1} parent=31 // pred_fallthru
          _
        // Predicated region
        $region37: #{attention_forward.1} parent=31 // pred_check
          %p242 = pneg %p62
        $region38: #{attention_forward.1} parent=31 // pred_check_branch
          %244 = sbr.rel (%p242) target = $region40
        $region39: #{attention_forward.1} parent=31 // pred_region
          %p245 = scmp.lt.s32.totalorder %s16, 1
          %s246 = scalar_select %p245, %s16, 1
          %s247 = smul.addr %s246, 8
          %s248 = scalar_lea.vmem %s1, %s247
        $region40: #{attention_forward.1} parent=31 // pred_fallthru
          _
        // Predicated region
        $region41: #{attention_forward.1} parent=31 // pred_check
          %p249 = pneg %p88
        $region42: #{attention_forward.1} parent=31 // pred_check_branch
          %251 = sbr.rel (%p249) target = $region44
        $region43: #{attention_forward.1} parent=31 // pred_region
          %p252 = scmp.lt.s32.totalorder %s16, 1
          %s253 = scalar_select %p252, %s16, 1
          %s254 = scalar_lea.vmem %s2, %s253
        $region44: #{attention_forward.1} parent=31 // pred_fallthru
          _
      $region32: #{attention_forward.1} parent=5 // pred_fallthru
        _
      %p255 = scmp.le.s32.totalorder 1, %s16
      %p256 = scmp.lt.s32.totalorder %s16, 3
      %p257 = pnand %p255, %p256
      %p258 = pneg %p257
      // Predicated region
      $region45: #{attention_forward.1} parent=5 // pred_check
        _
      $region46: #{attention_forward.1} parent=5 // pred_check_branch
        %260 = sbr.rel (%p257) target = $region48
      $region47: #{attention_forward.1} parent=5 // pred_region
        %s261 = ssub.s32 %s16, 1
        %p262 = scmp.lt.s32.totalorder %s21, 1
        %s263 = scalar_select %p262, %s21, 1
        %s264 = smul.addr %s263, 8
        %s265 = scalar_lea.vmem %s0, %s264
        %p266 = pneg %p42
        %p267 = pneg %p39
        %p268 = scmp.lt.s32.totalorder %s21, 1
        %s269 = scalar_select %p268, %s21, 1
        %s270 = smul.addr %s269, 8
        %s271 = scalar_lea.vmem %s1, %s270
        %p272 = pneg %p68
        %p273 = pneg %p65
        %p274 = scmp.lt.s32.totalorder %s21, 1
        %s275 = scalar_select %p274, %s21, 1
        %s276 = scalar_lea.vmem %s2, %s275
        %p277 = pneg %p94
        %p278 = pneg %p91
        %p279 = pneg %p115
        %p280 = pneg %p112
        %p281 = pneg %p136
        %p282 = pneg %p133
        %p283 = pneg %p157
        %p284 = pneg %p154
        %p285 = pneg %p178
        %p286 = pneg %p175
        %p287 = pneg %p204
        %p288 = pneg %p201
        %s289 = sand.u32 %s191, 1
        %s290 = scalar_lea.sflag [#allocation3], %s289
        %s291 = sand.u32 %s191, 1
        %s292 = smul.addr %s291, 8
        %s293 = scalar_lea.vmem [#allocation2], %s292
        %p294 = scmp.lt.s32.totalorder %s21, 1
        %s295 = scalar_select %p294, %s21, 1
        %s296 = smul.addr %s295, 8
        %s297 = scalar_lea.vmem %s0, %s296
        %p298 = scmp.lt.s32.totalorder %s21, 1
        %s299 = scalar_select %p298, %s21, 1
        %s300 = smul.addr %s299, 8
        %s301 = scalar_lea.vmem %s1, %s300
        %p302 = scmp.lt.s32.totalorder %s21, 1
        %s303 = scalar_select %p302, %s21, 1
        %s304 = scalar_lea.vmem %s2, %s303
        %v306 = vld [vmem:[%s297] sm:$0xff]
        %v307 = vpack.c.bf16 %v306, %v306
        %v308 = vld [vmem:[%s301] sm:$0xff]
        %v309 = vpack.c.bf16 %v308, %v308
        %v310 = vld [vmem:[%s3] sm:$0xff]
        %v311 = vld [vmem:[%s3 + $0x8] sm:$0xff]
        %v312 = vld [vmem:[%s3 + $0x10] sm:$0xff]
        %v313 = vld [vmem:[%s3 + $0x18] sm:$0xff]
        %v318 = vunpack.c.l.b16 %v310
        %v319 = vunpack.c.h.b16 %v310
        %v320 = vunpack.c.l.b16 %v311
        %v321 = vunpack.c.h.b16 %v311
        %v322 = vunpack.c.l.b16 %v312
        %v323 = vunpack.c.h.b16 %v312
        %v324 = vunpack.c.l.b16 %v313
        %v325 = vunpack.c.h.b16 %v313
        %v326 = vpack.c.b16 %v320, %v318
        %v327 = vpack.c.b16 %v321, %v319
        %v328 = vpack.c.b16 %v324, %v322
        %v329 = vpack.c.b16 %v325, %v323
        %vm334 = vcmask 261120
        %v336 = vsel %vm334, %v307, 0
        %338 = vmatpush.bf16.msra.mxu0 0
        %339 = vmatpush.bf16.msra.mxu0 0
        %340 = vmatpush.bf16.msra.mxu0 0
        %341 = vmatpush.bf16.msra.mxu0 0
        %342 = vmatpush.bf16.msra.mxu0 0
        %343 = vmatpush.bf16.msra.mxu0 0
        %344 = vmatpush.bf16.msra.mxu0 %v328
        %345 = vmatpush.bf16.msra.mxu0 %v326
        %346 = vmatmul.bf16.gmra.mxu0 %v336
        %v347 = vpop.f32.mrf.mxu0
        %v348 = vadd.f32 0.0, %v347
        %v349 = vpop.f32.mrf.mxu0
        %350 = vdwg.mxu0
        %351 = vmatpush.bf16.msra.mxu0 0
        %352 = vmatpush.bf16.msra.mxu0 0
        %353 = vmatpush.bf16.msra.mxu0 0
        %354 = vmatpush.bf16.msra.mxu0 0
        %355 = vmatpush.bf16.msra.mxu0 0
        %356 = vmatpush.bf16.msra.mxu0 0
        %357 = vmatpush.bf16.msra.mxu0 %v329
        %358 = vmatpush.bf16.msra.mxu0 %v327
        %359 = vmatmul.bf16.gmra.mxu0 %v336
        %v360 = vpop.f32.mrf.mxu0
        %v361 = vadd.f32 0.0, %v360
        %v362 = vpop.f32.mrf.mxu0
        %363 = vdwg.mxu0
        %v364 = vld [vmem:[%s4] sm:$0xff]
        %v365 = vld [vmem:[%s4 + $0x8] sm:$0xff]
        %v366 = vld [vmem:[%s4 + $0x10] sm:$0xff]
        %v367 = vld [vmem:[%s4 + $0x18] sm:$0xff]
        %v368 = vld [vmem:[%s4 + $0x20] sm:$0xff]
        %v369 = vld [vmem:[%s4 + $0x28] sm:$0xff]
        %v370 = vld [vmem:[%s4 + $0x30] sm:$0xff]
        %v371 = vld [vmem:[%s4 + $0x38] sm:$0xff]
        %v380 = vunpack.c.l.b16 %v364
        %v381 = vunpack.c.h.b16 %v364
        %v382 = vunpack.c.l.b16 %v365
        %v383 = vunpack.c.h.b16 %v365
        %v384 = vunpack.c.l.b16 %v366
        %v385 = vunpack.c.h.b16 %v366
        %v386 = vunpack.c.l.b16 %v367
        %v387 = vunpack.c.h.b16 %v367
        %v388 = vunpack.c.l.b16 %v368
        %v389 = vunpack.c.h.b16 %v368
        %v390 = vunpack.c.l.b16 %v369
        %v391 = vunpack.c.h.b16 %v369
        %v392 = vunpack.c.l.b16 %v370
        %v393 = vunpack.c.h.b16 %v370
        %v394 = vunpack.c.l.b16 %v371
        %v395 = vunpack.c.h.b16 %v371
        %v396 = vpack.c.b16 %v384, %v380
        %v397 = vpack.c.b16 %v385, %v381
        %v398 = vpack.c.b16 %v386, %v382
        %v399 = vpack.c.b16 %v387, %v383
        %v400 = vpack.c.b16 %v392, %v388
        %v401 = vpack.c.b16 %v393, %v389
        %v402 = vpack.c.b16 %v394, %v390
        %v403 = vpack.c.b16 %v395, %v391
        %v413 = vsel %vm334, %v309, 0
        %415 = vmatpush.bf16.msra.mxu0 0
        %416 = vmatpush.bf16.msra.mxu0 0
        %417 = vmatpush.bf16.msra.mxu0 0
        %418 = vmatpush.bf16.msra.mxu0 0
        %419 = vmatpush.bf16.msra.mxu0 0
        %420 = vmatpush.bf16.msra.mxu0 0
        %421 = vmatpush.bf16.msra.mxu0 %v400
        %422 = vmatpush.bf16.msra.mxu0 %v396
        %423 = vmatmul.bf16.gmra.mxu0 %v413
        %v424 = vpop.f32.mrf.mxu0
        %v425 = vadd.f32 0.0, %v424
        %v426 = vpop.f32.mrf.mxu0
        %427 = vdwg.mxu0
        %428 = vmatpush.bf16.msra.mxu0 0
        %429 = vmatpush.bf16.msra.mxu0 0
        %430 = vmatpush.bf16.msra.mxu0 0
        %431 = vmatpush.bf16.msra.mxu0 0
        %432 = vmatpush.bf16.msra.mxu0 0
        %433 = vmatpush.bf16.msra.mxu0 0
        %434 = vmatpush.bf16.msra.mxu0 %v401
        %435 = vmatpush.bf16.msra.mxu0 %v397
        %436 = vmatmul.bf16.gmra.mxu0 %v413
        %v437 = vpop.f32.mrf.mxu0
        %v438 = vadd.f32 0.0, %v437
        %v439 = vpop.f32.mrf.mxu0
        %440 = vdwg.mxu0
        %441 = vmatpush.bf16.msra.mxu0 0
        %442 = vmatpush.bf16.msra.mxu0 0
        %443 = vmatpush.bf16.msra.mxu0 0
        %444 = vmatpush.bf16.msra.mxu0 0
        %445 = vmatpush.bf16.msra.mxu0 0
        %446 = vmatpush.bf16.msra.mxu0 0
        %447 = vmatpush.bf16.msra.mxu0 %v402
        %448 = vmatpush.bf16.msra.mxu0 %v398
        %449 = vmatmul.bf16.gmra.mxu0 %v413
        %v450 = vpop.f32.mrf.mxu0
        %v451 = vadd.f32 0.0, %v450
        %v452 = vpop.f32.mrf.mxu0
        %453 = vdwg.mxu0
        %454 = vmatpush.bf16.msra.mxu0 0
        %455 = vmatpush.bf16.msra.mxu0 0
        %456 = vmatpush.bf16.msra.mxu0 0
        %457 = vmatpush.bf16.msra.mxu0 0
        %458 = vmatpush.bf16.msra.mxu0 0
        %459 = vmatpush.bf16.msra.mxu0 0
        %460 = vmatpush.bf16.msra.mxu0 %v403
        %461 = vmatpush.bf16.msra.mxu0 %v399
        %462 = vmatmul.bf16.gmra.mxu0 %v413
        %v463 = vpop.f32.mrf.mxu0
        %v464 = vadd.f32 0.0, %v463
        %v465 = vpop.f32.mrf.mxu0
        %466 = vdwg.mxu0
        %v467 = vpack.c.bf16 %v361, %v348
        %v468 = vpack.c.bf16 %v438, %v425
        %v469 = vpack.c.bf16 %v464, %v451
        %v471 = vrot.slane %v467, 4
        %472 = vrot.lane.b32.xlu0 %v467, 64
        %v473 = vpop.permute.xlu0 %472
        %v474 = vrot.slane %v473, 4
        %v476 = vrot.slane %v468, 4
        %477 = vrot.lane.b32.xlu0 %v468, 64
        %v478 = vpop.permute.xlu0 %477
        %v479 = vrot.slane %v478, 4
        %v481 = vrot.slane %v469, 4
        %482 = vrot.lane.b32.xlu0 %v469, 64
        %v483 = vpop.permute.xlu0 %482
        %v484 = vrot.slane %v483, 4
        %v485 = vld [vmem:[%s5] sm:$0xf]
        %v486 = vld [vmem:[%s5 + $0x4] sm:$0xf]
        %v487 = vld [vmem:[%s5 + $0x8] sm:$0xf]
        %v488 = vld [vmem:[%s5 + $0xc] sm:$0xf]
        %v489 = vld [vmem:[%s5 + $0x10] sm:$0xf]
        %v490 = vld [vmem:[%s5 + $0x14] sm:$0xf]
        %v491 = vld [vmem:[%s5 + $0x18] sm:$0xf]
        %v492 = vld [vmem:[%s5 + $0x1c] sm:$0xf]
        %v493 = vld [vmem:[%s5 + $0x20] sm:$0xf]
        %v494 = vld [vmem:[%s5 + $0x24] sm:$0xf]
        %v495 = vld [vmem:[%s5 + $0x28] sm:$0xf]
        %v496 = vld [vmem:[%s5 + $0x2c] sm:$0xf]
        %v497 = vld [vmem:[%s5 + $0x30] sm:$0xf]
        %v498 = vld [vmem:[%s5 + $0x34] sm:$0xf]
        %v499 = vld [vmem:[%s5 + $0x38] sm:$0xf]
        %v500 = vld [vmem:[%s5 + $0x3c] sm:$0xf]
        %v501 = vld [vmem:[%s5 + $0x40] sm:$0xf]
        %v502 = vld [vmem:[%s5 + $0x44] sm:$0xf]
        %v503 = vld [vmem:[%s5 + $0x48] sm:$0xf]
        %v504 = vld [vmem:[%s5 + $0x4c] sm:$0xf]
        %v505 = vld [vmem:[%s5 + $0x50] sm:$0xf]
        %v506 = vld [vmem:[%s5 + $0x54] sm:$0xf]
        %v507 = vld [vmem:[%s5 + $0x58] sm:$0xf]
        %v508 = vld [vmem:[%s5 + $0x5c] sm:$0xf]
        %v509 = vld [vmem:[%s5 + $0x60] sm:$0xf]
        %v510 = vld [vmem:[%s5 + $0x64] sm:$0xf]
        %v511 = vld [vmem:[%s5 + $0x68] sm:$0xf]
        %v512 = vld [vmem:[%s5 + $0x6c] sm:$0xf]
        %v513 = vld [vmem:[%s5 + $0x70] sm:$0xf]
        %v514 = vld [vmem:[%s5 + $0x74] sm:$0xf]
        %v515 = vld [vmem:[%s5 + $0x78] sm:$0xf]
        %v516 = vld [vmem:[%s5 + $0x7c] sm:$0xf]
        %v517 = vld [vmem:[%s6] sm:$0x1]
        %v518 = vld [vmem:[%s304] sm:$0x1]
        %v520 = vperm.slane %v518, 0
        %vm522 = vcmask 523264
        %v524 = vsel %vm522, %v467, 0
        %v527 = vsel %vm522, %v468, 0
        %529 = vmatpush.bf16.xpose.msra.mxu0 0
        %530 = vmatpush.bf16.xpose.msra.mxu0 0
        %531 = vmatpush.bf16.xpose.msra.mxu0 0
        %532 = vmatpush.bf16.xpose.msra.mxu0 0
        %533 = vmatpush.bf16.xpose.msra.mxu0 0
        %534 = vmatpush.bf16.xpose.msra.mxu0 0
        %535 = vmatpush.bf16.xpose.msra.mxu0 0
        %536 = vmatpush.bf16.xpose.msra.mxu0 %v527
        %537 = vmatmul.bf16.gmra.mxu0 %v524
        %v538 = vpop.f32.mrf.mxu0
        %v539 = vadd.f32 %v520, %v538
        %v540 = vpop.f32.mrf.mxu0
        %541 = vdwg.mxu0
        %v543 = vsel %vm522, %v473, 0
        %v546 = vsel %vm522, %v478, 0
        %548 = vmatpush.bf16.xpose.msra.mxu0 0
        %549 = vmatpush.bf16.xpose.msra.mxu0 0
        %550 = vmatpush.bf16.xpose.msra.mxu0 0
        %551 = vmatpush.bf16.xpose.msra.mxu0 0
        %552 = vmatpush.bf16.xpose.msra.mxu0 0
        %553 = vmatpush.bf16.xpose.msra.mxu0 0
        %554 = vmatpush.bf16.xpose.msra.mxu0 0
        %555 = vmatpush.bf16.xpose.msra.mxu0 %v546
        %556 = vmatmul.bf16.gmra.mxu0 %v543
        %v557 = vpop.f32.mrf.mxu0
        %v558 = vadd.f32 %v520, %v557
        %v559 = vpop.f32.mrf.mxu0
        %560 = vdwg.mxu0
        %v562 = vsel %vm522, %v471, 0
        %v565 = vsel %vm522, %v476, 0
        %567 = vmatpush.bf16.xpose.msra.mxu0 0
        %568 = vmatpush.bf16.xpose.msra.mxu0 0
        %569 = vmatpush.bf16.xpose.msra.mxu0 0
        %570 = vmatpush.bf16.xpose.msra.mxu0 0
        %571 = vmatpush.bf16.xpose.msra.mxu0 0
        %572 = vmatpush.bf16.xpose.msra.mxu0 0
        %573 = vmatpush.bf16.xpose.msra.mxu0 0
        %574 = vmatpush.bf16.xpose.msra.mxu0 %v565
        %575 = vmatmul.bf16.gmra.mxu0 %v562
        %v576 = vpop.f32.mrf.mxu0
        %v577 = vadd.f32 %v520, %v576
        %v578 = vpop.f32.mrf.mxu0
        %579 = vdwg.mxu0
        %v581 = vsel %vm522, %v474, 0
        %v584 = vsel %vm522, %v479, 0
        %586 = vmatpush.bf16.xpose.msra.mxu0 0
        %587 = vmatpush.bf16.xpose.msra.mxu0 0
        %588 = vmatpush.bf16.xpose.msra.mxu0 0
        %589 = vmatpush.bf16.xpose.msra.mxu0 0
        %590 = vmatpush.bf16.xpose.msra.mxu0 0
        %591 = vmatpush.bf16.xpose.msra.mxu0 0
        %592 = vmatpush.bf16.xpose.msra.mxu0 0
        %593 = vmatpush.bf16.xpose.msra.mxu0 %v584
        %594 = vmatmul.bf16.gmra.mxu0 %v581
        %v595 = vpop.f32.mrf.mxu0
        %v596 = vadd.f32 %v520, %v595
        %v597 = vpop.f32.mrf.mxu0
        %598 = vdwg.mxu0
        %vm599 = vcmask 64512
        %v600 = vsel %vm599, %v539, -inf
        %601 = vmax.xlane.f32.xlu0 %v600
        %v602 = vpop.xlane.xlu0 %601
        %v603 = vsel %vm599, %v558, -inf
        %604 = vmax.xlane.f32.xlu0 %v603
        %v605 = vpop.xlane.xlu0 %604
        %v606 = vsel %vm599, %v577, -inf
        %607 = vmax.xlane.f32.xlu0 %v606
        %v608 = vpop.xlane.xlu0 %607
        %v609 = vsel %vm599, %v596, -inf
        %610 = vmax.xlane.f32.xlu0 %v609
        %v611 = vpop.xlane.xlu0 %610
        %v612 = vsub.f32 %v539, %v602
        %v613 = vsub.f32 %v558, %v605
        %v614 = vsub.f32 %v577, %v608
        %v615 = vsub.f32 %v596, %v611
        %v616 = vmul.f32 %v612, 1.442695
        %v617 = vpow.pop %v616
        %v618 = vmul.f32 %v613, 1.442695
        %v619 = vpow.pop %v618
        %v620 = vmul.f32 %v614, 1.442695
        %v621 = vpow.pop %v620
        %v622 = vmul.f32 %v615, 1.442695
        %v623 = vpow.pop %v622
        %v624 = vsel %vm599, %v617, 0.0
        %625 = vadd.xlane.f32.xlu0 %v624
        %v626 = vpop.xlane.xlu0 %625
        %v627 = vsel %vm599, %v619, 0.0
        %628 = vadd.xlane.f32.xlu0 %v627
        %v629 = vpop.xlane.xlu0 %628
        %v630 = vsel %vm599, %v621, 0.0
        %631 = vadd.xlane.f32.xlu0 %v630
        %v632 = vpop.xlane.xlu0 %631
        %v633 = vsel %vm599, %v623, 0.0
        %634 = vadd.xlane.f32.xlu0 %v633
        %v635 = vpop.xlane.xlu0 %634
        %v636 = vrcp.pop %v626
        %v637 = vmul.f32 %v626, %v636
        %v638 = vsub.f32 1.0, %v637
        %v639 = vmul.f32 %v636, %v638
        %v640 = vadd.f32 %v636, %v639
        %vm641 = vweird.f32 %v626
        %vm642 = vweird.f32 %v636
        %vm643 = vmor %vm641, %vm642
        %v644 = vsel %vm643, %v636, %v640
        %v645 = vand.u32 2147483647, %v626
        %vm646 = vcmp.eq.f32.partialorder %v645, 8.507059e+37
        %v647 = vand.u32 %v626, 2147483648
        %v648 = vor.u32 1.1754944e-38, %v647
        %v649 = vsel %vm646, %v648, %v644
        %v650 = vmul.f32 %v617, %v649
        %v651 = vrcp.pop %v629
        %v652 = vmul.f32 %v629, %v651
        %v653 = vsub.f32 1.0, %v652
        %v654 = vmul.f32 %v651, %v653
        %v655 = vadd.f32 %v651, %v654
        %vm656 = vweird.f32 %v629
        %vm657 = vweird.f32 %v651
        %vm658 = vmor %vm656, %vm657
        %v659 = vsel %vm658, %v651, %v655
        %v660 = vand.u32 2147483647, %v629
        %vm661 = vcmp.eq.f32.partialorder %v660, 8.507059e+37
        %v662 = vand.u32 %v629, 2147483648
        %v663 = vor.u32 1.1754944e-38, %v662
        %v664 = vsel %vm661, %v663, %v659
        %v665 = vmul.f32 %v619, %v664
        %v666 = vrcp.pop %v632
        %v667 = vmul.f32 %v632, %v666
        %v668 = vsub.f32 1.0, %v667
        %v669 = vmul.f32 %v666, %v668
        %v670 = vadd.f32 %v666, %v669
        %vm671 = vweird.f32 %v632
        %vm672 = vweird.f32 %v666
        %vm673 = vmor %vm671, %vm672
        %v674 = vsel %vm673, %v666, %v670
        %v675 = vand.u32 2147483647, %v632
        %vm676 = vcmp.eq.f32.partialorder %v675, 8.507059e+37
        %v677 = vand.u32 %v632, 2147483648
        %v678 = vor.u32 1.1754944e-38, %v677
        %v679 = vsel %vm676, %v678, %v674
        %v680 = vmul.f32 %v621, %v679
        %v681 = vrcp.pop %v635
        %v682 = vmul.f32 %v635, %v681
        %v683 = vsub.f32 1.0, %v682
        %v684 = vmul.f32 %v681, %v683
        %v685 = vadd.f32 %v681, %v684
        %vm686 = vweird.f32 %v635
        %vm687 = vweird.f32 %v681
        %vm688 = vmor %vm686, %vm687
        %v689 = vsel %vm688, %v681, %v685
        %v690 = vand.u32 2147483647, %v635
        %vm691 = vcmp.eq.f32.partialorder %v690, 8.507059e+37
        %v692 = vand.u32 %v635, 2147483648
        %v693 = vor.u32 1.1754944e-38, %v692
        %v694 = vsel %vm691, %v693, %v689
        %v695 = vmul.f32 %v623, %v694
        %v696 = vpack.c.bf16 %v650, %v650
        %v697 = vpack.c.bf16 %v665, %v665
        %v698 = vpack.c.bf16 %v680, %v680
        %v699 = vpack.c.bf16 %v695, %v695
        %v701 = vsel %vm599, %v696, 0
        %vm703 = vcmask 1043456
        %v705 = vsel %vm703, %v469, 0
        %707 = vmatpush.bf16.msra.mxu0 0
        %708 = vmatpush.bf16.msra.mxu0 0
        %709 = vmatpush.bf16.msra.mxu0 0
        %710 = vmatpush.bf16.msra.mxu0 0
        %711 = vmatpush.bf16.msra.mxu0 0
        %712 = vmatpush.bf16.msra.mxu0 0
        %713 = vmatpush.bf16.msra.mxu0 0
        %714 = vmatpush.bf16.msra.mxu0 %v705
        %715 = vmatmul.bf16.gmra.mxu0 %v701
        %v716 = vpop.f32.mrf.mxu0
        %v717 = vadd.f32 0.0, %v716
        %v718 = vpop.f32.mrf.mxu0
        %719 = vdwg.mxu0
        %v721 = vsel %vm599, %v697, 0
        %v724 = vsel %vm703, %v483, 0
        %726 = vmatpush.bf16.msra.mxu0 0
        %727 = vmatpush.bf16.msra.mxu0 0
        %728 = vmatpush.bf16.msra.mxu0 0
        %729 = vmatpush.bf16.msra.mxu0 0
        %730 = vmatpush.bf16.msra.mxu0 0
        %731 = vmatpush.bf16.msra.mxu0 0
        %732 = vmatpush.bf16.msra.mxu0 0
        %733 = vmatpush.bf16.msra.mxu0 %v724
        %734 = vmatmul.bf16.gmra.mxu0 %v721
        %v735 = vpop.f32.mrf.mxu0
        %v736 = vadd.f32 0.0, %v735
        %v737 = vpop.f32.mrf.mxu0
        %738 = vdwg.mxu0
        %v740 = vsel %vm599, %v698, 0
        %v743 = vsel %vm703, %v481, 0
        %745 = vmatpush.bf16.msra.mxu0 0
        %746 = vmatpush.bf16.msra.mxu0 0
        %747 = vmatpush.bf16.msra.mxu0 0
        %748 = vmatpush.bf16.msra.mxu0 0
        %749 = vmatpush.bf16.msra.mxu0 0
        %750 = vmatpush.bf16.msra.mxu0 0
        %751 = vmatpush.bf16.msra.mxu0 0
        %752 = vmatpush.bf16.msra.mxu0 %v743
        %753 = vmatmul.bf16.gmra.mxu0 %v740
        %v754 = vpop.f32.mrf.mxu0
        %v755 = vadd.f32 0.0, %v754
        %v756 = vpop.f32.mrf.mxu0
        %757 = vdwg.mxu0
        %v759 = vsel %vm599, %v699, 0
        %v762 = vsel %vm703, %v484, 0
        %764 = vmatpush.bf16.msra.mxu0 0
        %765 = vmatpush.bf16.msra.mxu0 0
        %766 = vmatpush.bf16.msra.mxu0 0
        %767 = vmatpush.bf16.msra.mxu0 0
        %768 = vmatpush.bf16.msra.mxu0 0
        %769 = vmatpush.bf16.msra.mxu0 0
        %770 = vmatpush.bf16.msra.mxu0 0
        %771 = vmatpush.bf16.msra.mxu0 %v762
        %772 = vmatmul.bf16.gmra.mxu0 %v759
        %v773 = vpop.f32.mrf.mxu0
        %v774 = vadd.f32 0.0, %v773
        %v775 = vpop.f32.mrf.mxu0
        %776 = vdwg.mxu0
        %v777 = vpack.c.bf16 %v717, %v717
        %v778 = vpack.c.bf16 %v736, %v736
        %v779 = vpack.c.bf16 %v755, %v755
        %v780 = vpack.c.bf16 %v774, %v774
        %v789 = vunpack.c.l.b16 %v485
        %v790 = vunpack.c.l.b16 %v486
        %v791 = vunpack.c.l.b16 %v487
        %v792 = vunpack.c.l.b16 %v488
        %v793 = vunpack.c.l.b16 %v489
        %v794 = vunpack.c.l.b16 %v490
        %v795 = vunpack.c.l.b16 %v491
        %v796 = vunpack.c.l.b16 %v492
        %v797 = vpack.c.b16 %v790, %v789
        %v798 = vpack.c.b16 %v792, %v791
        %v799 = vpack.c.b16 %v794, %v793
        %v800 = vpack.c.b16 %v796, %v795
        %v806 = vsel %vm522, %v777, 0
        %808 = vmatpush.bf16.msra.mxu0 0
        %809 = vmatpush.bf16.msra.mxu0 0
        %810 = vmatpush.bf16.msra.mxu0 0
        %811 = vmatpush.bf16.msra.mxu0 0
        %812 = vmatpush.bf16.msra.mxu0 %v800
        %813 = vmatpush.bf16.msra.mxu0 %v799
        %814 = vmatpush.bf16.msra.mxu0 %v798
        %815 = vmatpush.bf16.msra.mxu0 %v797
        %816 = vmatmul.bf16.gmra.mxu0 %v806
        %v817 = vpop.f32.mrf.mxu0
        %v818 = vadd.f32 0.0, %v817
        %v819 = vpop.f32.mrf.mxu0
        %820 = vdwg.mxu0
        %v829 = vunpack.c.l.b16 %v493
        %v830 = vunpack.c.l.b16 %v494
        %v831 = vunpack.c.l.b16 %v495
        %v832 = vunpack.c.l.b16 %v496
        %v833 = vunpack.c.l.b16 %v497
        %v834 = vunpack.c.l.b16 %v498
        %v835 = vunpack.c.l.b16 %v499
        %v836 = vunpack.c.l.b16 %v500
        %v837 = vpack.c.b16 %v830, %v829
        %v838 = vpack.c.b16 %v832, %v831
        %v839 = vpack.c.b16 %v834, %v833
        %v840 = vpack.c.b16 %v836, %v835
        %v846 = vsel %vm522, %v778, 0
        %848 = vmatpush.bf16.msra.mxu0 0
        %849 = vmatpush.bf16.msra.mxu0 0
        %850 = vmatpush.bf16.msra.mxu0 0
        %851 = vmatpush.bf16.msra.mxu0 0
        %852 = vmatpush.bf16.msra.mxu0 %v840
        %853 = vmatpush.bf16.msra.mxu0 %v839
        %854 = vmatpush.bf16.msra.mxu0 %v838
        %855 = vmatpush.bf16.msra.mxu0 %v837
        %856 = vmatmul.bf16.gmra.mxu0 %v846
        %v857 = vpop.f32.mrf.mxu0
        %v858 = vadd.f32 0.0, %v857
        %v859 = vpop.f32.mrf.mxu0
        %860 = vdwg.mxu0
        %v869 = vunpack.c.l.b16 %v501
        %v870 = vunpack.c.l.b16 %v502
        %v871 = vunpack.c.l.b16 %v503
        %v872 = vunpack.c.l.b16 %v504
        %v873 = vunpack.c.l.b16 %v505
        %v874 = vunpack.c.l.b16 %v506
        %v875 = vunpack.c.l.b16 %v507
        %v876 = vunpack.c.l.b16 %v508
        %v877 = vpack.c.b16 %v870, %v869
        %v878 = vpack.c.b16 %v872, %v871
        %v879 = vpack.c.b16 %v874, %v873
        %v880 = vpack.c.b16 %v876, %v875
        %v886 = vsel %vm522, %v779, 0
        %888 = vmatpush.bf16.msra.mxu0 0
        %889 = vmatpush.bf16.msra.mxu0 0
        %890 = vmatpush.bf16.msra.mxu0 0
        %891 = vmatpush.bf16.msra.mxu0 0
        %892 = vmatpush.bf16.msra.mxu0 %v880
        %893 = vmatpush.bf16.msra.mxu0 %v879
        %894 = vmatpush.bf16.msra.mxu0 %v878
        %895 = vmatpush.bf16.msra.mxu0 %v877
        %896 = vmatmul.bf16.gmra.mxu0 %v886
        %v897 = vpop.f32.mrf.mxu0
        %v898 = vadd.f32 0.0, %v897
        %v899 = vpop.f32.mrf.mxu0
        %900 = vdwg.mxu0
        %v909 = vunpack.c.l.b16 %v509
        %v910 = vunpack.c.l.b16 %v510
        %v911 = vunpack.c.l.b16 %v511
        %v912 = vunpack.c.l.b16 %v512
        %v913 = vunpack.c.l.b16 %v513
        %v914 = vunpack.c.l.b16 %v514
        %v915 = vunpack.c.l.b16 %v515
        %v916 = vunpack.c.l.b16 %v516
        %v917 = vpack.c.b16 %v910, %v909
        %v918 = vpack.c.b16 %v912, %v911
        %v919 = vpack.c.b16 %v914, %v913
        %v920 = vpack.c.b16 %v916, %v915
        %v926 = vsel %vm522, %v780, 0
        %928 = vmatpush.bf16.msra.mxu0 0
        %929 = vmatpush.bf16.msra.mxu0 0
        %930 = vmatpush.bf16.msra.mxu0 0
        %931 = vmatpush.bf16.msra.mxu0 0
        %932 = vmatpush.bf16.msra.mxu0 %v920
        %933 = vmatpush.bf16.msra.mxu0 %v919
        %934 = vmatpush.bf16.msra.mxu0 %v918
        %935 = vmatpush.bf16.msra.mxu0 %v917
        %936 = vmatmul.bf16.gmra.mxu0 %v926
        %v937 = vpop.f32.mrf.mxu0
        %v938 = vadd.f32 0.0, %v937
        %v939 = vpop.f32.mrf.mxu0
        %940 = vdwg.mxu0
        %v941 = vadd.f32 %v818, %v858
        %v942 = vadd.f32 %v941, %v898
        %v943 = vadd.f32 %v942, %v938
        %v945 = vperm.slane %v517, 0
        %v947 = vadd.f32 %v943, %v945
        %v948 = vadd.f32 %v947, %v306
        %949 = vst.msk [vmem:[%s293] sm:$0xff] %vm334, %v948
        %s950 = sand.u32 %s191, 1
        %s951 = scalar_lea.sflag [#allocation3], %s950
        %s952 = sand.u32 %s191, 1
        %s953 = smul.addr %s952, 8
        %s954 = scalar_lea.vmem [#allocation2], %s953
        // Predicated region
        $region49: #{attention_forward.1} parent=47 // pred_check
          %p955 = pneg %p201
        $region50: #{attention_forward.1} parent=47 // pred_check_branch
          %957 = sbr.rel (%p955) target = $region52
        $region51: #{attention_forward.1} parent=47 // pred_region
          %959 = vsyncadd %s951, 0
          %s960 = smul.addr %s21, 8
          %s961 = scalar_lea.hbm %s7, %s960
          %s963 = sshll.u32 %s954, 4
          %s964 = int_to_ptr.vmem [resolvable:$true] %s963
          %s965 = sshll.u32 %s961, 4
          %s966 = int_to_ptr.hbm [resolvable:$true] %s965
          %968 = dma.vmem_to_hbm [thread:$0]  %s964, 128, %s966, %s951
        $region52: #{attention_forward.1} parent=47 // pred_fallthru
          _
      $region48: #{attention_forward.1} parent=5 // pred_fallthru
        _
      %p969 = scmp.le.s32.totalorder 2, %s16
      // Predicated region
      $region53: #{attention_forward.1} parent=5 // pred_check
        %p970 = pneg %p969
      $region54: #{attention_forward.1} parent=5 // pred_check_branch
        %972 = sbr.rel (%p970) target = $region56
      $region55: #{attention_forward.1} parent=5 // pred_region
        %s973 = ssub.s32 %s16, 2
        // Predicated region
        $region57: #{attention_forward.1} parent=55 // pred_check
          %p974 = pneg %p207
        $region58: #{attention_forward.1} parent=55 // pred_check_branch
          %976 = sbr.rel (%p974) target = $region60
        $region59: #{attention_forward.1} parent=55 // pred_region
          %s977 = sand.u32 %s192, 1
          %s978 = scalar_lea.sflag [#allocation3], %s977
          %s979 = sand.u32 %s192, 1
          %s980 = smul.addr %s979, 8
          %s981 = scalar_lea.vmem [#allocation2], %s980
          %983 = dma.done %s978, 128
        $region60: #{attention_forward.1} parent=55 // pred_fallthru
          _
      $region56: #{attention_forward.1} parent=5 // pred_fallthru
        _
    $region6: #{attention_forward.1} parent=1 // loop_footer
      %s20 = sadd.s32 1, %s16
    $region7: #{attention_forward.1} parent=1 // loop_footer_branch
      %15 = sbr.rel target = $region3
    $region8: #{attention_forward.1} parent=1 // loop_exit
      _
    %984 = vsyncpa [#allocation3], 1
    %s985 = scalar_lea.sflag [#allocation3], 1
    %986 = vsyncpa %s985, 1

</llo_original>
